<compile_context>
chip_gen: v7x
topology: tpu7x:2x2x1
jax: 0.10.0
libtpu: 0.0.40
codegen_flags: <defaults>
</compile_context>

<pallas_src>
import numpy as np
import jax
import jax.numpy as jnp
from jax import lax
from jax.experimental import pallas as pl
from jax.experimental.pallas import tpu as pltpu

_LANES = 128
_INV_PI = float(1.0 / np.pi)
_PI_2 = float(np.pi / 2.0)
_PI_4 = float(np.pi / 4.0)
_TAN_PI_8 = 0.4142135623730950   # tan(pi/8)
_TAN_3PI_8 = 2.414213562373095   # tan(3pi/8)


def _atan(r):
    """Elementwise arctan: Cephes-style range reduction + odd polynomial.

    Uses only mul/add/div/compare/select (all VPU/EUP-supported in Mosaic);
    ~1e-7 absolute error in f32.  _atan(0) == 0 exactly.
    """
    a = jnp.abs(r)
    big = a > jnp.float32(_TAN_3PI_8)
    mid = a > jnp.float32(_TAN_PI_8)
    # One shared divide covers both reductions; den >= 1 always (no div-by-0).
    num = jnp.where(big, jnp.float32(-1.0), a - jnp.float32(1.0))
    den = jnp.where(big, a, a + jnp.float32(1.0))
    x = jnp.where(mid, num / den, a)          # reduced arg, |x| <= tan(pi/8)
    ofs = jnp.where(big, jnp.float32(_PI_2),
                    jnp.where(mid, jnp.float32(_PI_4), jnp.float32(0.0)))
    z = x * x
    p = jnp.float32(8.05374449538e-2)
    p = p * z - jnp.float32(1.38776856032e-1)
    p = p * z + jnp.float32(1.99777106478e-1)
    p = p * z - jnp.float32(3.33329491539e-1)
    y = ofs + (p * z * x + x)
    return jnp.where(r < 0, -y, y)


def _quat_angle(inp_ref, tgt_ref):
    """Per-pixel quaternion angular distance / pi.  Refs: (1,3,S,128)."""
    i0 = inp_ref[0, 0].astype(jnp.float32)
    i1 = inp_ref[0, 1].astype(jnp.float32)
    i2 = inp_ref[0, 2].astype(jnp.float32)
    t0 = tgt_ref[0, 0].astype(jnp.float32)
    t1 = tgt_ref[0, 1].astype(jnp.float32)
    t2 = tgt_ref[0, 2].astype(jnp.float32)
    # Cross product of target with input; the sign flip from q_pred = -input
    # is irrelevant because every component is squared below.
    cx = t1 * i2 - t2 * i1
    cy = t2 * i0 - t0 * i2
    cz = t0 * i1 - t1 * i0
    # loss_re = -t . (-i) = t . i ; sign(x)*|x| == x, so no extra ops.
    real = t0 * i0 + t1 * i1 + t2 * i2
    dot = cx * cx + cy * cy + cz * cz
    # atan2(vec, real) = pi/2 - atan(real / vec)   (vec > 0 always)
    r = real * lax.rsqrt(jnp.maximum(dot, jnp.float32(1e-8)))
    return jnp.float32(0.5) - _atan(r) * jnp.float32(_INV_PI)


def _unmasked_kernel(inp_ref, tgt_ref, sum_ref, acc_ref):
    s = pl.program_id(1)

    @pl.when(s == 0)
    def _():
        acc_ref[...] = jnp.zeros_like(acc_ref)

    acc_ref[...] += _quat_angle(inp_ref, tgt_ref)

    @pl.when(s == pl.num_programs(1) - 1)
    def _():
        # Single cross-lane reduce + tiny store, once per batch.
        sum_ref[...] = jnp.sum(acc_ref[...]).reshape(1, 1, 1)


def _masked_kernel(inp_ref, tgt_ref, m0_ref, sum_ref, cnt_ref, acc_ref, macc_ref):
    s = pl.program_id(1)

    @pl.when(s == 0)
    def _():
        acc_ref[...] = jnp.zeros_like(acc_ref)
        macc_ref[...] = jnp.zeros_like(macc_ref)

    m0 = m0_ref[0].astype(jnp.float32)                 # (S, 128), zero-padded tail
    acc_ref[...] += _quat_angle(inp_ref, tgt_ref) * m0
    macc_ref[...] += m0

    @pl.when(s == pl.num_programs(1) - 1)
    def _():
        sum_ref[...] = jnp.sum(acc_ref[...]).reshape(1, 1, 1)
        cnt_ref[...] = jnp.sum(macc_ref[...]).reshape(1, 1, 1)


def _tiling(hw, max_rows):
    """Return (rows_padded, s_tile, num_tiles) for the flattened spatial dim."""
    rows = pl.cdiv(hw, _LANES)
    if rows <= max_rows:
        return rows, rows, 1                     # single full-extent tile, no row pad
    max_rows -= max_rows % 8
    # Prefer a multiple-of-8 tile that divides `rows` exactly -> zero row padding.
    lo = max(8, (max_rows // 4) - (max_rows // 4) % 8)
    for s in range(max_rows, lo - 1, -8):
        if rows % s == 0:
            return rows, s, rows // s
    # Fallback: large tile with minimal row padding (never rounds to ~2x).
    best_s, best_pad = max_rows, (-rows) % max_rows
    lo2 = max(8, (max_rows // 2) - (max_rows // 2) % 8)
    for s in range(max_rows, lo2 - 1, -8):
        pad = (-rows) % s
        if pad < best_pad:
            best_s, best_pad = s, pad
    rows_pad = rows + best_pad
    return rows_pad, best_s, rows_pad // best_s


def _pack(x, channels, b, hw, rows_pad):
    x = x.reshape(b, channels, hw)
    pad = rows_pad * _LANES - hw
    if pad:
        # Only triggers when HW is not 128-aligned (or the rare no-divisor
        # fallback).  In the common aligned case the reshape below is free.
        x = jnp.pad(x, ((0, 0), (0, 0), (0, pad)))
    return x.reshape(b, channels, rows_pad, _LANES)


def quaternion_loss(inp, target, mask=None, *, max_tile_rows=1024):
    """Matches quaternion_loss.forward(input, target, mask).

    max_tile_rows=1024 fits v5e's 16 MiB default scoped VMEM; 2048 is fine on
    v6e/v7x if you want fewer grid steps.
    """
    B, C, H, W = inp.shape
    assert C == 3, "quaternion_loss expects 3 channels (x, y, z)"
    HW = H * W
    rows_pad, s_tile, num_tiles = _tiling(HW, max_tile_rows)
    grid = (B, num_tiles)

    inp_t = _pack(inp, 3, B, HW, rows_pad)
    tgt_t = _pack(target, 3, B, HW, rows_pad)

    qt_spec = pl.BlockSpec((1, 3, s_tile, _LANES), lambda b, s: (b, 0, s, 0))
    part_spec = pl.BlockSpec((1, 1, 1), lambda b, s: (b, 0, 0))
    # B axis is independent (per-batch partial sums) -> megacore-parallel on
    # v7x; the row-tile axis carries the resident accumulator -> arbitrary.
    dims = ("parallel", "arbitrary")

    if mask is None:
        (partials,) = pl.pallas_call(
            _unmasked_kernel,
            out_shape=(jax.ShapeDtypeStruct((B, 1, 1), jnp.float32),),
            grid_spec=pltpu.PrefetchScalarGridSpec(
                num_scalar_prefetch=0,
                grid=grid,
                in_specs=[qt_spec, qt_spec],
                out_specs=(part_spec,),
                scratch_shapes=[pltpu.VMEM((s_tile, _LANES), jnp.float32)],
            ),
            compiler_params=pltpu.CompilerParams(dimension_semantics=dims),
        )(inp_t, tgt_t)
        total = jnp.sum(partials)
        # Zero-padded pixels contribute exactly atan2-equivalent loss 0.5 each;
        # correct analytically instead of masking every grid step.
        pad_pixels = B * (rows_pad * _LANES - HW)
        if pad_pixels:
            total = total - jnp.float32(0.5 * pad_pixels)
        return (total / jnp.float32(B * HW)).astype(inp.dtype)

    Cm = mask.shape[1]
    # Only channel 0 multiplies the loss; stream just that (any dtype, cast
    # in-kernel).  Padded tail is zero so it never pollutes sum or count.
    m0 = mask[:, 0].reshape(B, HW)
    pad = rows_pad * _LANES - HW
    if pad:
        m0 = jnp.pad(m0, ((0, 0), (0, pad)))
    m0_t = m0.reshape(B, rows_pad, _LANES)

    msum, mcnt = pl.pallas_call(
        _masked_kernel,
        out_shape=(
            jax.ShapeDtypeStruct((B, 1, 1), jnp.float32),
            jax.ShapeDtypeStruct((B, 1, 1), jnp.float32),
        ),
        grid_spec=pltpu.PrefetchScalarGridSpec(
            num_scalar_prefetch=0,
            grid=grid,
            in_specs=[
                qt_spec,
                qt_spec,
                pl.BlockSpec((1, s_tile, _LANES), lambda b, s: (b, s, 0)),
            ],
            out_specs=(part_spec, part_spec),
            scratch_shapes=[
                pltpu.VMEM((s_tile, _LANES), jnp.float32),
                pltpu.VMEM((s_tile, _LANES), jnp.float32),
            ],
        ),
        compiler_params=pltpu.CompilerParams(dimension_semantics=dims),
    )(inp_t, tgt_t, m0_t)

    count = jnp.sum(mcnt)
    if Cm > 1:
        # torch.sum(mask) counts ALL channels; only channel 0 went through the
        # kernel, so add the remainder with a tiny XLA reduction.
        count = count + jnp.sum(mask[:, 1:].astype(jnp.float32))
    return (jnp.sum(msum) / count).astype(inp.dtype)


def _reference(inp, target, mask):
    # Pure-JAX reference mirroring the PyTorch forward.
    q = -inp
    t0, t1, t2 = target[:, 0], target[:, 1], target[:, 2]
    q0, q1, q2 = q[:, 0], q[:, 1], q[:, 2]
    lx = t1 * q2 - t2 * q1
    ly = t2 * q0 - t0 * q2
    lz = t0 * q1 - t1 * q0
    lre = -t0 * q0 - t1 * q1 - t2 * q2
    dot = lx * lx + ly * ly + lz * lz
    vec = jnp.sqrt(jnp.maximum(dot, 1e-8))
    real = jnp.sign(lre) * jnp.abs(lre)
    loss = jnp.arctan2(vec, real) / np.pi  # (B, H, W)
    if mask is None:
        return jnp.mean(loss)
    count = jnp.sum(mask)
    return jnp.sum(loss * mask[:, 0]) / count


if __name__ == "__main__":
    key = jax.random.PRNGKey(0)
    k1, k2, k3, k4, k5, k6 = jax.random.split(key, 6)

    B, C, H, W = 2, 3, 16, 16
    x = jax.random.normal(k1, (B, C, H, W), dtype=jnp.float32)
    target = jax.random.normal(k2, (B, C, H, W), dtype=jnp.float32)
    mask = (jax.random.uniform(k3, (B, 1, H, W)) > 0.5).astype(jnp.float32)

    # masked path (single mask channel)
    out = jax.block_until_ready(quaternion_loss(x, target, mask))
    ref = _reference(x, target, mask)
    assert np.allclose(np.asarray(out), np.asarray(ref), rtol=1e-4, atol=1e-4), (out, ref)

    # multi-channel mask path (count uses all channels, loss uses channel 0)
    mask2 = (jax.random.uniform(k4, (B, 2, H, W)) > 0.3).astype(jnp.float32)
    out2 = jax.block_until_ready(quaternion_loss(x, target, mask2))
    ref2 = _reference(x, target, mask2)
    assert np.allclose(np.asarray(out2), np.asarray(ref2), rtol=1e-4, atol=1e-4), (out2, ref2)

    # mask=None (mean) path — no synthetic ones mask, no per-step valid mask
    out_nm = jax.block_until_ready(quaternion_loss(x, target, None))
    ref_nm = _reference(x, target, None)
    assert np.allclose(np.asarray(out_nm), np.asarray(ref_nm), rtol=1e-4, atol=1e-4), (out_nm, ref_nm)

    # non-128-aligned spatial size exercises the lane-pad + 0.5-correction path
    H2, W2 = 10, 10
    x2 = jax.random.normal(k5, (B, C, H2, W2), dtype=jnp.float32)
    t2 = jax.random.normal(k6, (B, C, H2, W2), dtype=jnp.float32)
    out_p = jax.block_until_ready(quaternion_loss(x2, t2, None))
    ref_p = _reference(x2, t2, None)
    assert np.allclose(np.asarray(out_p), np.asarray(ref_p), rtol=1e-4, atol=1e-4), (out_p, ref_p)

    print("KERNEL_OK")
</pallas_src>

<mosaic_0001>
module attributes {stable_mosaic.version = 11 : i64} {
  func.func @_masked_kernel(%arg0: i32, %arg1: i32, %arg2: memref<1x3x2x128xf32, #tpu.memory_space<vmem>>, %arg3: memref<1x3x2x128xf32, #tpu.memory_space<vmem>>, %arg4: memref<1x2x128xf32, #tpu.memory_space<vmem>>, %arg5: memref<1x1x1xf32, #tpu.memory_space<vmem>>, %arg6: memref<1x1x1xf32, #tpu.memory_space<vmem>>, %arg7: memref<2x128xf32, #tpu.memory_space<vmem>>, %arg8: memref<2x128xf32, #tpu.memory_space<vmem>>) attributes {dimension_semantics = [#tpu.dimension_semantics<parallel>, #tpu.dimension_semantics<arbitrary>], iteration_bounds = array<i64: 2, 1>, scalar_prefetch = 0 : i64, scratch_operands = 2 : i64, tpu.core_type = #tpu.core_type<tc>, window_params = [{transform_indices = @transform_0, window_bounds = array<i64: 1, 3, 2, 128>}, {transform_indices = @transform_1, window_bounds = array<i64: 1, 3, 2, 128>}, {transform_indices = @transform_2, window_bounds = array<i64: 1, 2, 128>}, {transform_indices = @transform_3, window_bounds = array<i64: 1, 1, 1>}, {transform_indices = @transform_4, window_bounds = array<i64: 1, 1, 1>}]} {
    %c0_i32 = arith.constant 0 : i32
    %0 = arith.cmpi eq, %arg1, %c0_i32 : i32
    %1 = arith.extui %0 : i1 to i32
    %c0_i32_0 = arith.constant 0 : i32
    %2 = arith.cmpi ne, %1, %c0_i32_0 : i32
    scf.if %2 {
      %cst_51 = arith.constant 0.000000e+00 : f32
      %93 = vector.broadcast %cst_51 : f32 to vector<2x128xf32>
      %c0_52 = arith.constant 0 : index
      %c0_53 = arith.constant 0 : index
      %94 = vector.load %arg7[%c0_52, %c0_53] : memref<2x128xf32, #tpu.memory_space<vmem>>, vector<2x128xf32>
      tpu.vector_store %arg7[%c0_52, %c0_53], %93 {strides = array<i32>} : memref<2x128xf32, #tpu.memory_space<vmem>>, vector<2x128xf32>,
      %cst_54 = arith.constant 0.000000e+00 : f32
      %95 = vector.broadcast %cst_54 : f32 to vector<2x128xf32>
      %c0_55 = arith.constant 0 : index
      %c0_56 = arith.constant 0 : index
      %96 = vector.load %arg8[%c0_55, %c0_56] : memref<2x128xf32, #tpu.memory_space<vmem>>, vector<2x128xf32>
      tpu.vector_store %arg8[%c0_55, %c0_56], %95 {strides = array<i32>} : memref<2x128xf32, #tpu.memory_space<vmem>>, vector<2x128xf32>,
    } else {
    }
    %c0 = arith.constant 0 : index
    %c0_1 = arith.constant 0 : index
    %c0_2 = arith.constant 0 : index
    %3 = vector.load %arg4[%c0, %c0_1, %c0_2] : memref<1x2x128xf32, #tpu.memory_space<vmem>>, vector<1x2x128xf32>
    %4 = vector.shape_cast %3 : vector<1x2x128xf32> to vector<2x128xf32>
    %c0_3 = arith.constant 0 : index
    %c0_4 = arith.constant 0 : index
    %5 = vector.load %arg7[%c0_3, %c0_4] : memref<2x128xf32, #tpu.memory_space<vmem>>, vector<2x128xf32>
    %c0_5 = arith.constant 0 : index
    %c0_6 = arith.constant 0 : index
    %c0_7 = arith.constant 0 : index
    %c0_8 = arith.constant 0 : index
    %6 = vector.load %arg2[%c0_5, %c0_6, %c0_7, %c0_8] : memref<1x3x2x128xf32, #tpu.memory_space<vmem>>, vector<1x1x2x128xf32>
    %7 = vector.shape_cast %6 : vector<1x1x2x128xf32> to vector<2x128xf32>
    %c0_9 = arith.constant 0 : index
    %c1 = arith.constant 1 : index
    %c0_10 = arith.constant 0 : index
    %c0_11 = arith.constant 0 : index
    %8 = vector.load %arg2[%c0_9, %c1, %c0_10, %c0_11] : memref<1x3x2x128xf32, #tpu.memory_space<vmem>>, vector<1x1x2x128xf32>
    %9 = vector.shape_cast %8 : vector<1x1x2x128xf32> to vector<2x128xf32>
    %c0_12 = arith.constant 0 : index
    %c2 = arith.constant 2 : index
    %c0_13 = arith.constant 0 : index
    %c0_14 = arith.constant 0 : index
    %10 = vector.load %arg2[%c0_12, %c2, %c0_13, %c0_14] : memref<1x3x2x128xf32, #tpu.memory_space<vmem>>, vector<1x1x2x128xf32>
    %11 = vector.shape_cast %10 : vector<1x1x2x128xf32> to vector<2x128xf32>
    %c0_15 = arith.constant 0 : index
    %c0_16 = arith.constant 0 : index
    %c0_17 = arith.constant 0 : index
    %c0_18 = arith.constant 0 : index
    %12 = vector.load %arg3[%c0_15, %c0_16, %c0_17, %c0_18] : memref<1x3x2x128xf32, #tpu.memory_space<vmem>>, vector<1x1x2x128xf32>
    %13 = vector.shape_cast %12 : vector<1x1x2x128xf32> to vector<2x128xf32>
    %c0_19 = arith.constant 0 : index
    %c1_20 = arith.constant 1 : index
    %c0_21 = arith.constant 0 : index
    %c0_22 = arith.constant 0 : index
    %14 = vector.load %arg3[%c0_19, %c1_20, %c0_21, %c0_22] : memref<1x3x2x128xf32, #tpu.memory_space<vmem>>, vector<1x1x2x128xf32>
    %15 = vector.shape_cast %14 : vector<1x1x2x128xf32> to vector<2x128xf32>
    %c0_23 = arith.constant 0 : index
    %c2_24 = arith.constant 2 : index
    %c0_25 = arith.constant 0 : index
    %c0_26 = arith.constant 0 : index
    %16 = vector.load %arg3[%c0_23, %c2_24, %c0_25, %c0_26] : memref<1x3x2x128xf32, #tpu.memory_space<vmem>>, vector<1x1x2x128xf32>
    %17 = vector.shape_cast %16 : vector<1x1x2x128xf32> to vector<2x128xf32>
    %18 = arith.mulf %15, %11 : vector<2x128xf32>
    %19 = arith.mulf %17, %9 : vector<2x128xf32>
    %20 = arith.subf %18, %19 : vector<2x128xf32>
    %21 = arith.mulf %17, %7 : vector<2x128xf32>
    %22 = arith.mulf %13, %11 : vector<2x128xf32>
    %23 = arith.subf %21, %22 : vector<2x128xf32>
    %24 = arith.mulf %13, %9 : vector<2x128xf32>
    %25 = arith.mulf %15, %7 : vector<2x128xf32>
    %26 = arith.subf %24, %25 : vector<2x128xf32>
    %27 = arith.mulf %13, %7 : vector<2x128xf32>
    %28 = arith.mulf %15, %9 : vector<2x128xf32>
    %29 = arith.addf %27, %28 : vector<2x128xf32>
    %30 = arith.mulf %17, %11 : vector<2x128xf32>
    %31 = arith.addf %29, %30 : vector<2x128xf32>
    %32 = arith.mulf %20, %20 : vector<2x128xf32>
    %33 = arith.mulf %23, %23 : vector<2x128xf32>
    %34 = arith.addf %32, %33 : vector<2x128xf32>
    %35 = arith.mulf %26, %26 : vector<2x128xf32>
    %36 = arith.addf %34, %35 : vector<2x128xf32>
    %cst = arith.constant 9.99999993E-9 : f32
    %37 = vector.broadcast %cst : f32 to vector<2x128xf32>
    %38 = arith.maximumf %36, %37 : vector<2x128xf32>
    %39 = math.rsqrt %38 : vector<2x128xf32>
    %40 = arith.mulf %31, %39 : vector<2x128xf32>
    %41 = math.absf %40 : vector<2x128xf32>
    %cst_27 = arith.constant 2.41421366 : f32
    %42 = vector.broadcast %cst_27 : f32 to vector<2x128xf32>
    %43 = arith.cmpf ogt, %41, %42 : vector<2x128xf32>
    %cst_28 = arith.constant 0.414213568 : f32
    %44 = vector.broadcast %cst_28 : f32 to vector<2x128xf32>
    %45 = arith.cmpf ogt, %41, %44 : vector<2x128xf32>
    %cst_29 = arith.constant 1.000000e+00 : f32
    %46 = vector.broadcast %cst_29 : f32 to vector<2x128xf32>
    %47 = arith.subf %41, %46 : vector<2x128xf32>
    %cst_30 = arith.constant -1.000000e+00 : f32
    %48 = vector.broadcast %cst_30 : f32 to vector<2x128xf32>
    %49 = arith.select %43, %48, %47 : vector<2x128xi1>, vector<2x128xf32>
    %cst_31 = arith.constant 1.000000e+00 : f32
    %50 = vector.broadcast %cst_31 : f32 to vector<2x128xf32>
    %51 = arith.addf %41, %50 : vector<2x128xf32>
    %52 = arith.select %43, %41, %51 : vector<2x128xi1>, vector<2x128xf32>
    %53 = arith.divf %49, %52 : vector<2x128xf32>
    %54 = arith.select %45, %53, %41 : vector<2x128xi1>, vector<2x128xf32>
    %cst_32 = arith.constant 0.785398185 : f32
    %cst_33 = arith.constant 0.000000e+00 : f32
    %55 = vector.broadcast %cst_32 : f32 to vector<2x128xf32>
    %56 = vector.broadcast %cst_33 : f32 to vector<2x128xf32>
    %57 = arith.select %45, %55, %56 : vector<2x128xi1>, vector<2x128xf32>
    %cst_34 = arith.constant 1.57079637 : f32
    %58 = vector.broadcast %cst_34 : f32 to vector<2x128xf32>
    %59 = arith.select %43, %58, %57 : vector<2x128xi1>, vector<2x128xf32>
    %60 = arith.mulf %54, %54 : vector<2x128xf32>
    %cst_35 = arith.constant 0.0805374458 : f32
    %61 = vector.broadcast %cst_35 : f32 to vector<2x128xf32>
    %62 = arith.mulf %61, %60 : vector<2x128xf32>
    %cst_36 = arith.constant 0.138776854 : f32
    %63 = vector.broadcast %cst_36 : f32 to vector<2x128xf32>
    %64 = arith.subf %62, %63 : vector<2x128xf32>
    %65 = arith.mulf %64, %60 : vector<2x128xf32>
    %cst_37 = arith.constant 0.199777111 : f32
    %66 = vector.broadcast %cst_37 : f32 to vector<2x128xf32>
    %67 = arith.addf %65, %66 : vector<2x128xf32>
    %68 = arith.mulf %67, %60 : vector<2x128xf32>
    %cst_38 = arith.constant 0.333329499 : f32
    %69 = vector.broadcast %cst_38 : f32 to vector<2x128xf32>
    %70 = arith.subf %68, %69 : vector<2x128xf32>
    %71 = arith.mulf %70, %60 : vector<2x128xf32>
    %72 = arith.mulf %71, %54 : vector<2x128xf32>
    %73 = arith.addf %72, %54 : vector<2x128xf32>
    %74 = arith.addf %59, %73 : vector<2x128xf32>
    %cst_39 = arith.constant 0.000000e+00 : f32
    %75 = vector.broadcast %cst_39 : f32 to vector<2x128xf32>
    %76 = arith.cmpf olt, %40, %75 : vector<2x128xf32>
    %cst_40 = arith.constant 0.000000e+00 : f32
    %77 = vector.broadcast %cst_40 : f32 to vector<2x128xf32>
    %78 = arith.subf %77, %74 : vector<2x128xf32>
    %79 = arith.select %76, %78, %74 : vector<2x128xi1>, vector<2x128xf32>
    %cst_41 = arith.constant 0.318309873 : f32
    %80 = vector.broadcast %cst_41 : f32 to vector<2x128xf32>
    %81 = arith.mulf %79, %80 : vector<2x128xf32>
    %cst_42 = arith.constant 5.000000e-01 : f32
    %82 = vector.broadcast %cst_42 : f32 to vector<2x128xf32>
    %83 = arith.subf %82, %81 : vector<2x128xf32>
    %84 = arith.mulf %83, %4 : vector<2x128xf32>
    %85 = arith.addf %5, %84 : vector<2x128xf32>
    %c0_43 = arith.constant 0 : index
    %c0_44 = arith.constant 0 : index
    %86 = vector.load %arg7[%c0_43, %c0_44] : memref<2x128xf32, #tpu.memory_space<vmem>>, vector<2x128xf32>
    tpu.vector_store %arg7[%c0_43, %c0_44], %85 {strides = array<i32>} : memref<2x128xf32, #tpu.memory_space<vmem>>, vector<2x128xf32>,
    %c0_45 = arith.constant 0 : index
    %c0_46 = arith.constant 0 : index
    %87 = vector.load %arg8[%c0_45, %c0_46] : memref<2x128xf32, #tpu.memory_space<vmem>>, vector<2x128xf32>
    %88 = arith.addf %87, %4 : vector<2x128xf32>
    %c0_47 = arith.constant 0 : index
    %c0_48 = arith.constant 0 : index
    %89 = vector.load %arg8[%c0_47, %c0_48] : memref<2x128xf32, #tpu.memory_space<vmem>>, vector<2x128xf32>
    tpu.vector_store %arg8[%c0_47, %c0_48], %88 {strides = array<i32>} : memref<2x128xf32, #tpu.memory_space<vmem>>, vector<2x128xf32>,
    %c0_i32_49 = arith.constant 0 : i32
    %90 = arith.cmpi eq, %arg1, %c0_i32_49 : i32
    %91 = arith.extui %90 : i1 to i32
    %c0_i32_50 = arith.constant 0 : i32
    %92 = arith.cmpi ne, %91, %c0_i32_50 : i32
    scf.if %92 {
      %c0_51 = arith.constant 0 : index
      %c0_52 = arith.constant 0 : index
      %93 = vector.load %arg7[%c0_51, %c0_52] : memref<2x128xf32, #tpu.memory_space<vmem>>, vector<2x128xf32>
      %94 = vector.shape_cast %93 : vector<2x128xf32> to vector<1x2x128xf32>
      %cst_53 = arith.constant dense<0.000000e+00> : vector<1xf32>
      %95 = vector.multi_reduction <add>, %94, %cst_53 [1, 2] : vector<1x2x128xf32> to vector<1xf32>
      %96 = vector.shape_cast %95 : vector<1xf32> to vector<1x1x1xf32>
      %97 = vector.extract %96[0, 0, 0] : f32 from vector<1x1x1xf32>
      %98 = vector.broadcast %97 : f32 to vector<1x1x1xf32>
      %c0_54 = arith.constant 0 : index
      %c0_55 = arith.constant 0 : index
      %c0_56 = arith.constant 0 : index
      %99 = vector.load %arg5[%c0_54, %c0_55, %c0_56] : memref<1x1x1xf32, #tpu.memory_space<vmem>>, vector<1x1x1xf32>
      tpu.vector_store %arg5[%c0_54, %c0_55, %c0_56], %98 {strides = array<i32>} : memref<1x1x1xf32, #tpu.memory_space<vmem>>, vector<1x1x1xf32>,
      %c0_57 = arith.constant 0 : index
      %c0_58 = arith.constant 0 : index
      %100 = vector.load %arg8[%c0_57, %c0_58] : memref<2x128xf32, #tpu.memory_space<vmem>>, vector<2x128xf32>
      %101 = vector.shape_cast %100 : vector<2x128xf32> to vector<1x2x128xf32>
      %cst_59 = arith.constant dense<0.000000e+00> : vector<1xf32>
      %102 = vector.multi_reduction <add>, %101, %cst_59 [1, 2] : vector<1x2x128xf32> to vector<1xf32>
      %103 = vector.shape_cast %102 : vector<1xf32> to vector<1x1x1xf32>
      %104 = vector.extract %103[0, 0, 0] : f32 from vector<1x1x1xf32>
      %105 = vector.broadcast %104 : f32 to vector<1x1x1xf32>
      %c0_60 = arith.constant 0 : index
      %c0_61 = arith.constant 0 : index
      %c0_62 = arith.constant 0 : index
      %106 = vector.load %arg6[%c0_60, %c0_61, %c0_62] : memref<1x1x1xf32, #tpu.memory_space<vmem>>, vector<1x1x1xf32>
      tpu.vector_store %arg6[%c0_60, %c0_61, %c0_62], %105 {strides = array<i32>} : memref<1x1x1xf32, #tpu.memory_space<vmem>>, vector<1x1x1xf32>,
    } else {
    }
    return
  }
  func.func @transform_0(%arg0: i32, %arg1: i32) -> (i32, i32, i32, i32) {
    %c0_i32 = arith.constant 0 : i32
    %c0_i32_0 = arith.constant 0 : i32
    %c0_i32_1 = arith.constant 0 : i32
    return %arg0, %c0_i32, %arg1, %c0_i32_0 : i32, i32, i32, i32
  }
  func.func @transform_1(%arg0: i32, %arg1: i32) -> (i32, i32, i32, i32) {
    %c0_i32 = arith.constant 0 : i32
    %c0_i32_0 = arith.constant 0 : i32
    %c0_i32_1 = arith.constant 0 : i32
    return %arg0, %c0_i32, %arg1, %c0_i32_0 : i32, i32, i32, i32
  }
  func.func @transform_2(%arg0: i32, %arg1: i32) -> (i32, i32, i32) {
    %c0_i32 = arith.constant 0 : i32
    %c0_i32_0 = arith.constant 0 : i32
    return %arg0, %arg1, %c0_i32 : i32, i32, i32
  }
  func.func @transform_3(%arg0: i32, %arg1: i32) -> (i32, i32, i32) {
    %c0_i32 = arith.constant 0 : i32
    %c0_i32_0 = arith.constant 0 : i32
    %c0_i32_1 = arith.constant 0 : i32
    return %arg0, %c0_i32, %c0_i32_0 : i32, i32, i32
  }
  func.func @transform_4(%arg0: i32, %arg1: i32) -> (i32, i32, i32) {
    %c0_i32 = arith.constant 0 : i32
    %c0_i32_0 = arith.constant 0 : i32
    %c0_i32_1 = arith.constant 0 : i32
    return %arg0, %c0_i32, %c0_i32_0 : i32, i32, i32
  }
}

</mosaic_0001>

<llo_original>
// kernel: tpu_custom_call.1
$region0: #{tpu_custom_call.1}
  #allocation0 [shape = 'u32[]', space=smem, size = 0x4, offset = 0x4, fixed_abs, tag = 'smem constant byte address 0x4 - core index']
  #allocation1 [shape = 'u32[144,128]{1,0:T(1,128)}', space=vmem, size = 0x12000, scoped, tag = 'internal scratch']
  #allocation2 [shape = 'f32[2,128]{1,0:T(2,128)}', space=vmem, size = 0x400, scoped, tag = 'scratch operand']
  #allocation3 [shape = 'f32[2,128]{1,0:T(2,128)}', space=vmem, size = 0x400, scoped, tag = 'scratch operand']
  %s0 = inlined_call_operand.hbm [shape: f32[2,3,2,128], index: 0, kind: input, shape index: {}]
  %s1 = inlined_call_operand.hbm [shape: f32[2,3,2,128], index: 1, kind: input, shape index: {}]
  %s2 = inlined_call_operand.vmem [shape: f32[2,2,128], index: 2, kind: input, shape index: {}]
  %s3 = inlined_call_operand.vmem [shape: f32[2,1,1], index: 3, kind: output, shape index: {0}]
  %s4 = inlined_call_operand.vmem [shape: f32[2,1,1], index: 4, kind: output, shape index: {1}]
  %5 = xla_tuple %s3, %s4
  %s6 = sld [smem:[#allocation0]]
  $region69: #{tpu_custom_call.1} parent=0
    _
  %s8 = ssub.s32 1, %s6
  %s9 = scalar_select 0, %s8, %s6
  $region1: #{tpu_custom_call.1} parent=0
    #allocation4 [shape = 'u8[6144]{0}', space=vmem, size = 0x1800, scoped, tag = 'input window, operand 0']
    #allocation5 [shape = 's32[2]{0}', space=sflag, size = 0x8, scoped, tag = 'scoped memory for tpu_custom_call.1']
    #allocation6 [shape = 'u8[6144]{0}', space=vmem, size = 0x1800, scoped, tag = 'input window, operand 1']
    #allocation7 [shape = 's32[2]{0}', space=sflag, size = 0x8, scoped, tag = 'scoped memory for tpu_custom_call.1']
    %10 = vsyncpa [#allocation5], 0
    %s11 = scalar_lea.sflag [#allocation5], 1
    %12 = vsyncpa %s11, 0
    %13 = vsyncpa [#allocation7], 0
    %s14 = scalar_lea.sflag [#allocation7], 1
    %15 = vsyncpa %s14, 0
    loop: start=0, step=1, limit=4
    $region2: #{tpu_custom_call.1} parent=1 // loop_pre_header
      _
    $region3: #{tpu_custom_call.1} parent=1 // loop_header
      %s17 = sphi 0, %s21
      %p18 = scmp.ge.s32.totalorder %s17, 4
      %s24 = sphi 0, %s36
      %s25 = sphi 0, %s32
      %s26 = sphi 0, %s24
      %s27 = sphi 0, %s25
      %s28 = sphi 0, %s26
      %s29 = sphi 0, %s27
      %s41 = sphi 0, %s43
      %s44 = sphi 0, %s41
      %s45 = sphi 0, %s44
      %s61 = sphi 0, %s45
      %s69 = sphi 0, %s71
      %s72 = sphi 0, %s69
      %s73 = sphi 0, %s72
      %s89 = sphi 0, %s73
      %s97 = sphi 0, %s99
      %s100 = sphi 0, %s97
      %s101 = sphi 0, %s100
      %s117 = sphi 0, %s101
      %s123 = sphi 0, %s125
      %s126 = sphi 0, %s123
      %s127 = sphi 0, %s126
      %s143 = sphi 0, %s127
      %s149 = sphi 0, %s151
      %s152 = sphi 0, %s149
      %s153 = sphi 0, %s152
      %s169 = sphi 0, %s153
    $region4: #{tpu_custom_call.1} parent=1 // loop_header_branch
      %20 = sbr.rel (%p18) target = $region8
    $region5: #{tpu_custom_call.1} parent=1 // loop_body
      %s22 = ssub.s32 %s17, 1
      %s23 = ssub.s32 %s17, 2
      %s30 = sadd.s32 1, %s25
      %p31 = scmp.ge.s32.totalorder %s30, 1
      %s32 = scalar_select %p31, 0, %s30
      %s33 = sadd.s32 1, %s24
      %s34 = scalar_select %p31, %s33, %s24
      %p35 = scmp.ge.s32.totalorder %s34, 2
      %s36 = scalar_select %p35, 0, %s34
      %s37 = ssub.s32 %s24, %s36
      %s38 = ssub.s32 %s25, %s32
      %s39 = sor.u32 %s37, %s38
      %p40 = scmp.eq.s32.totalorder %s39, 0
      %s42 = sadd.s32 %s41, 1
      %s43 = scalar_select %p40, %s41, %s42
      %p46 = pneg %p40
      %p47 = scmp.eq.s32.totalorder %s17, 1
      %p48 = por %p46, %p47
      %p49 = scmp.ne.s32.totalorder %s41, %s44
      %p50 = scmp.eq.s32.totalorder %s17, 0
      %p51 = por %p49, %p50
      %p52 = scmp.ne.s32.totalorder %s41, %s44
      %p53 = scmp.eq.s32.totalorder %s22, 1
      %p54 = por %p52, %p53
      %p55 = scmp.ne.s32.totalorder %s44, %s45
      %p56 = scmp.eq.s32.totalorder %s22, 0
      %p57 = por %p55, %p56
      %p58 = scmp.ne.s32.totalorder %s44, %s45
      %p59 = scmp.eq.s32.totalorder %s23, 1
      %p60 = por %p58, %p59
      %p62 = scmp.ne.s32.totalorder %s45, %s61
      %p63 = scmp.eq.s32.totalorder %s23, 0
      %p64 = por %p62, %p63
      %s65 = ssub.s32 %s24, %s36
      %s66 = ssub.s32 %s25, %s32
      %s67 = sor.u32 %s65, %s66
      %p68 = scmp.eq.s32.totalorder %s67, 0
      %s70 = sadd.s32 %s69, 1
      %s71 = scalar_select %p68, %s69, %s70
      %p74 = pneg %p68
      %p75 = scmp.eq.s32.totalorder %s17, 1
      %p76 = por %p74, %p75
      %p77 = scmp.ne.s32.totalorder %s69, %s72
      %p78 = scmp.eq.s32.totalorder %s17, 0
      %p79 = por %p77, %p78
      %p80 = scmp.ne.s32.totalorder %s69, %s72
      %p81 = scmp.eq.s32.totalorder %s22, 1
      %p82 = por %p80, %p81
      %p83 = scmp.ne.s32.totalorder %s72, %s73
      %p84 = scmp.eq.s32.totalorder %s22, 0
      %p85 = por %p83, %p84
      %p86 = scmp.ne.s32.totalorder %s72, %s73
      %p87 = scmp.eq.s32.totalorder %s23, 1
      %p88 = por %p86, %p87
      %p90 = scmp.ne.s32.totalorder %s73, %s89
      %p91 = scmp.eq.s32.totalorder %s23, 0
      %p92 = por %p90, %p91
      %s93 = ssub.s32 %s24, %s36
      %s94 = ssub.s32 %s25, %s32
      %s95 = sor.u32 %s93, %s94
      %p96 = scmp.eq.s32.totalorder %s95, 0
      %s98 = sadd.s32 %s97, 1
      %s99 = scalar_select %p96, %s97, %s98
      %p102 = pneg %p96
      %p103 = scmp.eq.s32.totalorder %s17, 1
      %p104 = por %p102, %p103
      %p105 = scmp.ne.s32.totalorder %s97, %s100
      %p106 = scmp.eq.s32.totalorder %s17, 0
      %p107 = por %p105, %p106
      %p108 = scmp.ne.s32.totalorder %s97, %s100
      %p109 = scmp.eq.s32.totalorder %s22, 1
      %p110 = por %p108, %p109
      %p111 = scmp.ne.s32.totalorder %s100, %s101
      %p112 = scmp.eq.s32.totalorder %s22, 0
      %p113 = por %p111, %p112
      %p114 = scmp.ne.s32.totalorder %s100, %s101
      %p115 = scmp.eq.s32.totalorder %s23, 1
      %p116 = por %p114, %p115
      %p118 = scmp.ne.s32.totalorder %s101, %s117
      %p119 = scmp.eq.s32.totalorder %s23, 0
      %p120 = por %p118, %p119
      %s121 = ssub.s32 %s24, %s36
      %p122 = scmp.eq.s32.totalorder %s121, 0
      %s124 = sadd.s32 %s123, 1
      %s125 = scalar_select %p122, %s123, %s124
      %p128 = pneg %p122
      %p129 = scmp.eq.s32.totalorder %s17, 1
      %p130 = por %p128, %p129
      %p131 = scmp.ne.s32.totalorder %s123, %s126
      %p132 = scmp.eq.s32.totalorder %s17, 0
      %p133 = por %p131, %p132
      %p134 = scmp.ne.s32.totalorder %s123, %s126
      %p135 = scmp.eq.s32.totalorder %s22, 1
      %p136 = por %p134, %p135
      %p137 = scmp.ne.s32.totalorder %s126, %s127
      %p138 = scmp.eq.s32.totalorder %s22, 0
      %p139 = por %p137, %p138
      %p140 = scmp.ne.s32.totalorder %s126, %s127
      %p141 = scmp.eq.s32.totalorder %s23, 1
      %p142 = por %p140, %p141
      %p144 = scmp.ne.s32.totalorder %s127, %s143
      %p145 = scmp.eq.s32.totalorder %s23, 0
      %p146 = por %p144, %p145
      %s147 = ssub.s32 %s24, %s36
      %p148 = scmp.eq.s32.totalorder %s147, 0
      %s150 = sadd.s32 %s149, 1
      %s151 = scalar_select %p148, %s149, %s150
      %p154 = pneg %p148
      %p155 = scmp.eq.s32.totalorder %s17, 1
      %p156 = por %p154, %p155
      %p157 = scmp.ne.s32.totalorder %s149, %s152
      %p158 = scmp.eq.s32.totalorder %s17, 0
      %p159 = por %p157, %p158
      %p160 = scmp.ne.s32.totalorder %s149, %s152
      %p161 = scmp.eq.s32.totalorder %s22, 1
      %p162 = por %p160, %p161
      %p163 = scmp.ne.s32.totalorder %s152, %s153
      %p164 = scmp.eq.s32.totalorder %s22, 0
      %p165 = por %p163, %p164
      %p166 = scmp.ne.s32.totalorder %s152, %s153
      %p167 = scmp.eq.s32.totalorder %s23, 1
      %p168 = por %p166, %p167
      %p170 = scmp.ne.s32.totalorder %s153, %s169
      %p171 = scmp.eq.s32.totalorder %s23, 0
      %p172 = por %p170, %p171
      %p173 = scmp.le.s32.totalorder 1, %s17
      %p174 = scmp.lt.s32.totalorder %s17, 3
      %p175 = pnand %p173, %p174
      %p176 = pneg %p175
      // Predicated region
      $region9: #{tpu_custom_call.1} parent=5 // pred_check
        _
      $region10: #{tpu_custom_call.1} parent=5 // pred_check_branch
        %178 = sbr.rel (%p175) target = $region12
      $region11: #{tpu_custom_call.1} parent=5 // pred_region
        %s179 = ssub.s32 %s17, 1
      $region12: #{tpu_custom_call.1} parent=5 // pred_fallthru
        _
      %p180 = scmp.lt.s32.totalorder %s17, 2
      // Predicated region
      $region13: #{tpu_custom_call.1} parent=5 // pred_check
        %p181 = pneg %p180
      $region14: #{tpu_custom_call.1} parent=5 // pred_check_branch
        %183 = sbr.rel (%p181) target = $region16
      $region15: #{tpu_custom_call.1} parent=5 // pred_region
        // Predicated region
        $region17: #{tpu_custom_call.1} parent=15 // pred_check
          %p184 = pneg %p51
        $region18: #{tpu_custom_call.1} parent=15 // pred_check_branch
          %186 = sbr.rel (%p184) target = $region20
        $region19: #{tpu_custom_call.1} parent=15 // pred_region
          %s187 = sand.u32 %s41, 1
          %s188 = scalar_lea.sflag [#allocation5], %s187
          %s189 = sand.u32 %s41, 1
          %s190 = smul.addr %s189, 6
          %s191 = scalar_lea.vmem [#allocation4], %s190
          %s193 = ssub.s32 96, 96
          %194 = vsyncadd %s188, %s193
          %s195 = smul.addr %s24, 3
          %s196 = sadd.s32 %s25, %s195
          %s197 = smul.addr %s196, 32
          %s198 = scalar_lea.hbm %s0, %s197
          %s199 = sshll.u32 %s191, 4
          %s200 = int_to_ptr.vmem [resolvable:$true] %s199
          %205 = dma.hbm_to_vmem [thread:$0]  %s198, 96, %s200, %s188, 32, 32, 2
        $region20: #{tpu_custom_call.1} parent=15 // pred_fallthru
          _
        // Predicated region
        $region21: #{tpu_custom_call.1} parent=15 // pred_check
          %p206 = pneg %p79
        $region22: #{tpu_custom_call.1} parent=15 // pred_check_branch
          %208 = sbr.rel (%p206) target = $region24
        $region23: #{tpu_custom_call.1} parent=15 // pred_region
          %s209 = sand.u32 %s69, 1
          %s210 = scalar_lea.sflag [#allocation7], %s209
          %s211 = sand.u32 %s69, 1
          %s212 = smul.addr %s211, 6
          %s213 = scalar_lea.vmem [#allocation6], %s212
          %s215 = ssub.s32 96, 96
          %216 = vsyncadd %s210, %s215
          %s217 = smul.addr %s24, 3
          %s218 = sadd.s32 %s25, %s217
          %s219 = smul.addr %s218, 32
          %s220 = scalar_lea.hbm %s1, %s219
          %s221 = sshll.u32 %s213, 4
          %s222 = int_to_ptr.vmem [resolvable:$true] %s221
          %227 = dma.hbm_to_vmem [thread:$0]  %s220, 96, %s222, %s210, 32, 32, 2
        $region24: #{tpu_custom_call.1} parent=15 // pred_fallthru
          _
        // Predicated region
        $region25: #{tpu_custom_call.1} parent=15 // pred_check
          %p228 = pneg %p107
        $region26: #{tpu_custom_call.1} parent=15 // pred_check_branch
          %230 = sbr.rel (%p228) target = $region28
        $region27: #{tpu_custom_call.1} parent=15 // pred_region
          %p231 = scmp.lt.s32.totalorder %s24, 1
          %s232 = scalar_select %p231, %s24, 1
          %p233 = scmp.lt.s32.totalorder %s25, 0
          %s234 = scalar_select %p233, %s25, 0
          %s235 = sadd.s32 %s234, %s232
          %s236 = smul.addr %s235, 2
          %s237 = scalar_lea.vmem %s2, %s236
        $region28: #{tpu_custom_call.1} parent=15 // pred_fallthru
          _
      $region16: #{tpu_custom_call.1} parent=5 // pred_fallthru
        _
      %p238 = scmp.le.s32.totalorder 1, %s17
      %p239 = scmp.lt.s32.totalorder %s17, 3
      %p240 = pnand %p238, %p239
      %p241 = pneg %p240
      // Predicated region
      $region29: #{tpu_custom_call.1} parent=5 // pred_check
        _
      $region30: #{tpu_custom_call.1} parent=5 // pred_check_branch
        %243 = sbr.rel (%p240) target = $region32
      $region31: #{tpu_custom_call.1} parent=5 // pred_region
        %s244 = ssub.s32 %s17, 1
        %s245 = sand.u32 %s44, 1
        %s246 = scalar_lea.sflag [#allocation5], %s245
        %s247 = sand.u32 %s44, 1
        %s248 = smul.addr %s247, 6
        %s249 = scalar_lea.vmem [#allocation4], %s248
        // Predicated region
        $region33: #{tpu_custom_call.1} parent=31 // pred_check
          %p250 = pneg %p57
        $region34: #{tpu_custom_call.1} parent=31 // pred_check_branch
          %252 = sbr.rel (%p250) target = $region36
        $region35: #{tpu_custom_call.1} parent=31 // pred_region
          %253 = dma.done %s246, 96
        $region36: #{tpu_custom_call.1} parent=31 // pred_fallthru
          _
        %s254 = sand.u32 %s72, 1
        %s255 = scalar_lea.sflag [#allocation7], %s254
        %s256 = sand.u32 %s72, 1
        %s257 = smul.addr %s256, 6
        %s258 = scalar_lea.vmem [#allocation6], %s257
        // Predicated region
        $region37: #{tpu_custom_call.1} parent=31 // pred_check
          %p259 = pneg %p85
        $region38: #{tpu_custom_call.1} parent=31 // pred_check_branch
          %261 = sbr.rel (%p259) target = $region40
        $region39: #{tpu_custom_call.1} parent=31 // pred_region
          %262 = dma.done %s255, 96
        $region40: #{tpu_custom_call.1} parent=31 // pred_fallthru
          _
        %s263 = sand.u32 %s44, 1
        %s264 = scalar_lea.sflag [#allocation5], %s263
        %s265 = sand.u32 %s44, 1
        %s266 = smul.addr %s265, 6
        %s267 = scalar_lea.vmem [#allocation4], %s266
        %p268 = pneg %p57
        %p269 = pneg %p54
        %s270 = sand.u32 %s72, 1
        %s271 = scalar_lea.sflag [#allocation7], %s270
        %s272 = sand.u32 %s72, 1
        %s273 = smul.addr %s272, 6
        %s274 = scalar_lea.vmem [#allocation6], %s273
        %p275 = pneg %p85
        %p276 = pneg %p82
        %p277 = scmp.lt.s32.totalorder %s26, 1
        %s278 = scalar_select %p277, %s26, 1
        %p279 = scmp.lt.s32.totalorder %s27, 0
        %s280 = scalar_select %p279, %s27, 0
        %s281 = sadd.s32 %s280, %s278
        %s282 = smul.addr %s281, 2
        %s283 = scalar_lea.vmem %s2, %s282
        %p284 = pneg %p113
        %p285 = pneg %p110
        %p286 = pneg %p139
        %p287 = pneg %p136
        %p288 = scmp.lt.s32.totalorder %s26, 1
        %s289 = scalar_select %p288, %s26, 1
        %s290 = scalar_lea.vmem %s3, %s289
        %p291 = pneg %p165
        %p292 = pneg %p162
        %p293 = scmp.lt.s32.totalorder %s26, 1
        %s294 = scalar_select %p293, %s26, 1
        %s295 = scalar_lea.vmem %s4, %s294
        %p296 = scmp.lt.s32.totalorder %s26, 1
        %s297 = scalar_select %p296, %s26, 1
        %p298 = scmp.lt.s32.totalorder %s27, 0
        %s299 = scalar_select %p298, %s27, 0
        %s300 = sadd.s32 %s299, %s297
        %s301 = smul.addr %s300, 2
        %s302 = scalar_lea.vmem %s2, %s301
        %p303 = scmp.lt.s32.totalorder %s26, 1
        %s304 = scalar_select %p303, %s26, 1
        %s305 = scalar_lea.vmem %s3, %s304
        %p306 = scmp.lt.s32.totalorder %s26, 1
        %s307 = scalar_select %p306, %s26, 1
        %s308 = scalar_lea.vmem %s4, %s307
        %p309 = scmp.eq.s32.totalorder %s27, 0
        // Predicated region
        $region41: #{tpu_custom_call.1} parent=31 // pred_check
          %p310 = pneg %p309
        $region42: #{tpu_custom_call.1} parent=31 // pred_check_branch
          %312 = sbr.rel (%p310) target = $region44
        $region43: #{tpu_custom_call.1} parent=31 // pred_region
          %313 = vst [vmem:[#allocation2] sm:$0x3] 0.0
          %314 = vst [vmem:[#allocation3] sm:$0x3] 0.0
        $region44: #{tpu_custom_call.1} parent=31 // pred_fallthru
          _
        %v315 = vld [vmem:[%s302] sm:$0x3]
        %v316 = vld [vmem:[#allocation2] sm:$0x3]
        %v317 = vld [vmem:[%s249] sm:$0x3]
        %s318 = scalar_lea.vmem %s249, 2 [#allocation4]
        %v319 = vld [vmem:[%s318] sm:$0x3]
        %s320 = scalar_lea.vmem %s249, 4 [#allocation4]
        %v321 = vld [vmem:[%s320] sm:$0x3]
        %v322 = vld [vmem:[%s258] sm:$0x3]
        %s323 = scalar_lea.vmem %s258, 2 [#allocation6]
        %v324 = vld [vmem:[%s323] sm:$0x3]
        %s325 = scalar_lea.vmem %s258, 4 [#allocation6]
        %v326 = vld [vmem:[%s325] sm:$0x3]
        %v327 = vmul.f32 %v324, %v321
        %v328 = vmul.f32 %v326, %v319
        %v329 = vsub.f32 %v327, %v328
        %v330 = vmul.f32 %v326, %v317
        %v331 = vmul.f32 %v322, %v321
        %v332 = vsub.f32 %v330, %v331
        %v333 = vmul.f32 %v322, %v319
        %v334 = vmul.f32 %v324, %v317
        %v335 = vsub.f32 %v333, %v334
        %v336 = vmul.f32 %v322, %v317
        %v337 = vmul.f32 %v324, %v319
        %v338 = vadd.f32 %v336, %v337
        %v339 = vmul.f32 %v326, %v321
        %v340 = vadd.f32 %v338, %v339
        %v341 = vmul.f32 %v329, %v329
        %v342 = vmul.f32 %v332, %v332
        %v343 = vadd.f32 %v341, %v342
        %v344 = vmul.f32 %v335, %v335
        %v345 = vadd.f32 %v343, %v344
        %v346 = vmax.f32 %v345, 1e-08
        %v347 = vrsqrt.pop %v346
        %v348 = vmul.f32 %v340, %v347
        %v349 = vand.u32 2147483647, %v348
        %vm350 = vcmp.gt.f32.partialorder %v349, 2.4142137
        %vm351 = vcmp.gt.f32.partialorder %v349, 0.41421357
        %v352 = vsub.f32 %v349, 1.0
        %v353 = vsel %vm350, -1.0, %v352
        %v354 = vadd.f32 %v349, 1.0
        %v355 = vsel %vm350, %v349, %v354
        %v356 = vrcp.pop %v355
        %v357 = vmul.f32 %v353, %v356
        %v358 = vsel %vm351, %v357, %v349
        %v359 = vsel %vm351, 0.7853982, 0.0
        %v360 = vsel %vm350, 1.5707964, %v359
        %v361 = vmul.f32 %v358, %v358
        %v362 = vmul.f32 %v361, 0.080537446
        %v363 = vsub.f32 %v362, 0.13877685
        %v364 = vmul.f32 %v363, %v361
        %v365 = vadd.f32 %v364, 0.19977711
        %v366 = vmul.f32 %v365, %v361
        %v367 = vsub.f32 %v366, 0.3333295
        %v368 = vmul.f32 %v367, %v361
        %v369 = vmul.f32 %v368, %v358
        %v370 = vadd.f32 %v369, %v358
        %v371 = vadd.f32 %v360, %v370
        %vm372 = vcmp.lt.f32.partialorder %v348, 0.0
        %v373 = vsub.f32 0.0, %v371
        %v374 = vsel %vm372, %v373, %v371
        %v375 = vmul.f32 %v374, 0.31830987
        %v376 = vsub.f32 0.5, %v375
        %v377 = vmul.f32 %v376, %v315
        %v378 = vadd.f32 %v316, %v377
        %379 = vst [vmem:[#allocation2] sm:$0x3] %v378
        %v380 = vld [vmem:[#allocation3] sm:$0x3]
        %v381 = vadd.f32 %v380, %v315
        %382 = vst [vmem:[#allocation3] sm:$0x3] %v381
        // Predicated region
        $region45: #{tpu_custom_call.1} parent=31 // pred_check
          %p383 = pneg %p309
        $region46: #{tpu_custom_call.1} parent=31 // pred_check_branch
          %385 = sbr.rel (%p383) target = $region48
        $region47: #{tpu_custom_call.1} parent=31 // pred_region
          %v386 = vld [vmem:[#allocation2] sm:$0x3]
          %vm387 = vcmask 1041408
          %v388 = vsel %vm387, %v386, 0.0
          %389 = vadd.xlane.f32.xlu0 %v388
          %v390 = vpop.xlane.xlu0 %389
          %v391 = vrot.slane %v390, 4
          %v392 = vadd.f32 %v390, %v391
          %v393 = vrot.slane %v392, 2
          %v394 = vadd.f32 %v392, %v393
          %v395 = vrot.slane %v394, 1
          %v396 = vadd.f32 %v394, %v395
          %s397 = vtos %v396
          %v398 = vstv %s397
          %vm399 = vcmask 0
          %400 = vst.msk [vmem:[%s305] sm:$0x1] %vm399, %v398
          %v401 = vld [vmem:[#allocation3] sm:$0x3]
          %v402 = vsel %vm387, %v401, 0.0
          %403 = vadd.xlane.f32.xlu0 %v402
          %v404 = vpop.xlane.xlu0 %403
          %v405 = vrot.slane %v404, 4
          %v406 = vadd.f32 %v404, %v405
          %v407 = vrot.slane %v406, 2
          %v408 = vadd.f32 %v406, %v407
          %v409 = vrot.slane %v408, 1
          %v410 = vadd.f32 %v408, %v409
          %s411 = vtos %v410
          %v412 = vstv %s411
          %413 = vst.msk [vmem:[%s308] sm:$0x1] %vm399, %v412
        $region48: #{tpu_custom_call.1} parent=31 // pred_fallthru
          _
        %p414 = scmp.lt.s32.totalorder %s26, 1
        %s415 = scalar_select %p414, %s26, 1
        %s416 = scalar_lea.vmem %s3, %s415
        %p417 = scmp.lt.s32.totalorder %s26, 1
        %s418 = scalar_select %p417, %s26, 1
        %s419 = scalar_lea.vmem %s4, %s418
        // Predicated region
        $region49: #{tpu_custom_call.1} parent=31 // pred_check
          %p420 = pneg %p136
        $region50: #{tpu_custom_call.1} parent=31 // pred_check_branch
          %422 = sbr.rel (%p420) target = $region52
        $region51: #{tpu_custom_call.1} parent=31 // pred_region
          _
        $region52: #{tpu_custom_call.1} parent=31 // pred_fallthru
          _
        // Predicated region
        $region53: #{tpu_custom_call.1} parent=31 // pred_check
          %p423 = pneg %p162
        $region54: #{tpu_custom_call.1} parent=31 // pred_check_branch
          %425 = sbr.rel (%p423) target = $region56
        $region55: #{tpu_custom_call.1} parent=31 // pred_region
          _
        $region56: #{tpu_custom_call.1} parent=31 // pred_fallthru
          _
      $region32: #{tpu_custom_call.1} parent=5 // pred_fallthru
        _
      %p426 = scmp.le.s32.totalorder 2, %s17
      // Predicated region
      $region57: #{tpu_custom_call.1} parent=5 // pred_check
        %p427 = pneg %p426
      $region58: #{tpu_custom_call.1} parent=5 // pred_check_branch
        %429 = sbr.rel (%p427) target = $region60
      $region59: #{tpu_custom_call.1} parent=5 // pred_region
        %s430 = ssub.s32 %s17, 2
        // Predicated region
        $region61: #{tpu_custom_call.1} parent=59 // pred_check
          %p431 = pneg %p142
        $region62: #{tpu_custom_call.1} parent=59 // pred_check_branch
          %433 = sbr.rel (%p431) target = $region64
        $region63: #{tpu_custom_call.1} parent=59 // pred_region
          %p434 = scmp.lt.s32.totalorder %s28, 1
          %s435 = scalar_select %p434, %s28, 1
          %s436 = scalar_lea.vmem %s3, %s435
        $region64: #{tpu_custom_call.1} parent=59 // pred_fallthru
          _
        // Predicated region
        $region65: #{tpu_custom_call.1} parent=59 // pred_check
          %p437 = pneg %p168
        $region66: #{tpu_custom_call.1} parent=59 // pred_check_branch
          %439 = sbr.rel (%p437) target = $region68
        $region67: #{tpu_custom_call.1} parent=59 // pred_region
          %p440 = scmp.lt.s32.totalorder %s28, 1
          %s441 = scalar_select %p440, %s28, 1
          %s442 = scalar_lea.vmem %s4, %s441
        $region68: #{tpu_custom_call.1} parent=59 // pred_fallthru
          _
      $region60: #{tpu_custom_call.1} parent=5 // pred_fallthru
        _
    $region6: #{tpu_custom_call.1} parent=1 // loop_footer
      %s21 = sadd.s32 1, %s17
    $region7: #{tpu_custom_call.1} parent=1 // loop_footer_branch
      %16 = sbr.rel target = $region3
    $region8: #{tpu_custom_call.1} parent=1 // loop_exit
      _
    %443 = vsyncpa [#allocation5], 1
    %s444 = scalar_lea.sflag [#allocation5], 1
    %445 = vsyncpa %s444, 1
    %446 = vsyncpa [#allocation7], 1
    %s447 = scalar_lea.sflag [#allocation7], 1
    %448 = vsyncpa %s447, 1

</llo_original>
